<compile_context>
chip_gen: v7x
topology: tpu7x:2x2x1
jax: 0.10.0
libtpu: 0.0.40
codegen_flags: <defaults>
</compile_context>

<pallas_src>
import math

import jax
import jax.numpy as jnp
from jax.experimental import pallas as pl
from jax.experimental.pallas import tpu as pltpu

HID = 7 * 7 * 32  # 1568


def decoder_kernel(x_ref, w_ref, b_ref, o_ref):
    # x_ref: (TB, latent_dim), w_ref: (latent_dim, HID), b_ref: (1, HID)
    y = jnp.dot(x_ref[...], w_ref[...], preferred_element_type=jnp.float32)
    y = y + b_ref[...]                      # f32 epilogue
    o_ref[...] = jnp.maximum(y, 0.0).astype(o_ref.dtype)  # cast only at store


def _round_up(n, m):
    return ((n + m - 1) // m) * m


def _default_tb():
    """Pick a batch tile that fits the default scoped-VMEM budget per chip."""
    try:
        kind = jax.devices()[0].device_kind.lower()
    except Exception:  # pragma: no cover - be conservative if query fails
        return 512
    if any(v in kind for v in ("v2", "v3", "v4", "v5")):
        return 512   # v5e: 16 MiB default scoped VMEM; bigger tiles buy little
    return 1024      # v6e / v7x: ~12.8 MB double-buffered f32 output fits 32 MiB


def decoder_forward(x, w, b, *, tb=None, out_dtype=jnp.float32, unflatten=True):
    """x: (B, latent_dim); w: (latent_dim, HID); b: (HID,).

    Returns (B, 7, 7, 32) (or flat (B, HID) when unflatten=False).
    out_dtype: output storage dtype (e.g. jnp.bfloat16 to halve the dominant
    HBM writeback traffic). Matmul accumulation and bias+ReLU stay f32.
    """
    B, latent_dim = x.shape
    assert w.shape == (latent_dim, HID), w.shape
    assert b.shape == (HID,), b.shape

    if tb is None:
        tb = _default_tb()
    # The block's second-to-last dim must be a multiple of 8 (or the full array
    # dim); round user-supplied tb up so e.g. tb=500 can't fail lowering.
    tb = max(8, _round_up(int(tb), 8))

    b8 = _round_up(B, 8)
    tb_eff = min(tb, b8)
    # Once the batch supports two >=128-row tiles, make sure the grid has at
    # least 2 parallel steps so both v7x TensorCores get work.
    if b8 >= 256 and pl.cdiv(B, tb_eff) < 2:
        tb_eff = _round_up(pl.cdiv(b8, 2), 8)

    grid = (pl.cdiv(B, tb_eff),)  # ragged last block is masked by Pallas

    b2d = b.reshape(1, HID).astype(jnp.float32)

    out_flat = pl.pallas_call(
        decoder_kernel,
        out_shape=jax.ShapeDtypeStruct((B, HID), out_dtype),
        grid_spec=pltpu.PrefetchScalarGridSpec(
            num_scalar_prefetch=0,
            grid=grid,
            in_specs=[
                pl.BlockSpec((tb_eff, latent_dim), lambda i: (i, 0)),  # x tile
                pl.BlockSpec((latent_dim, HID), lambda i: (0, 0)),     # resident weight
                pl.BlockSpec((1, HID), lambda i: (0, 0)),              # resident bias
            ],
            out_specs=pl.BlockSpec((tb_eff, HID), lambda i: (i, 0)),
        ),
        compiler_params=pltpu.CompilerParams(
            dimension_semantics=("parallel",),  # v7x: shard batch tiles over both TCs
        ),
    )(x, w, b2d)

    if not unflatten:
        return out_flat
    # nn.Unflatten(1, (7, 7, 32)): (B, 1568) -> (B, 7, 7, 32). Prefer
    # unflatten=False on hot paths so XLA can fuse/avoid this relayout.
    return out_flat.reshape(B, 7, 7, 32)


def init_params(key, latent_dim):
    """Deterministic init mimicking PyTorch nn.Linear default (uniform +-1/sqrt(fan_in))."""
    kw, kb = jax.random.split(key)
    bound = 1.0 / math.sqrt(latent_dim)
    # PyTorch stores weight as (out, in); we keep (in, out) so the kernel does x @ w.
    w = jax.random.uniform(kw, (latent_dim, HID), jnp.float32, -bound, bound)
    b = jax.random.uniform(kb, (HID,), jnp.float32, -bound, bound)
    return w, b


if __name__ == "__main__":
    key = jax.random.PRNGKey(0)
    k_x, k_x2, k_x3, k_p = jax.random.split(key, 4)

    latent_dim = 8
    w, b = init_params(k_p, latent_dim)

    # Small batch (module-default sizes): B=2, latent_dim=8.
    B = 2
    x = jax.random.normal(k_x, (B, latent_dim), jnp.float32)
    out = jax.block_until_ready(decoder_forward(x, w, b))
    ref = jnp.maximum(x @ w + b, 0.0).reshape(B, 7, 7, 32)
    assert out.shape == (B, 7, 7, 32), out.shape
    assert jnp.allclose(out, ref, atol=1e-5, rtol=1e-5), "f32 mismatch vs reference"

    # Multi-step grid with a ragged last block (no pad/slice path anymore).
    B2 = 20
    x2 = jax.random.normal(k_x2, (B2, latent_dim), jnp.float32)
    out2 = jax.block_until_ready(decoder_forward(x2, w, b, tb=8))
    ref2_flat = jnp.maximum(x2 @ w + b, 0.0)
    ref2 = ref2_flat.reshape(B2, 7, 7, 32)
    assert out2.shape == (B2, 7, 7, 32), out2.shape
    assert jnp.allclose(out2, ref2, atol=1e-5, rtol=1e-5), "gridded mismatch vs reference"

    # Flat-output hot path (skips the unflatten relayout).
    out2_flat = jax.block_until_ready(decoder_forward(x2, w, b, tb=8, unflatten=False))
    assert out2_flat.shape == (B2, HID), out2_flat.shape
    assert jnp.allclose(out2_flat, ref2_flat, atol=1e-5, rtol=1e-5), "flat mismatch"

    # bf16 *output* path (halves the dominant HBM writeback bytes); matmul and
    # epilogue stay f32, so only output rounding — loose tolerance.
    out_bf16 = jax.block_until_ready(
        decoder_forward(x2, w, b, tb=8, out_dtype=jnp.bfloat16))
    assert out_bf16.dtype == jnp.bfloat16
    assert jnp.allclose(out_bf16.astype(jnp.float32), ref2, atol=2e-2, rtol=2e-2), \
        "bf16-out mismatch vs reference"

    # Mid-size batch: exercises the "split into >=2 parallel tiles" heuristic
    # plus a ragged last block with the default (chip-dependent) tile size.
    B3 = 260
    x3 = jax.random.normal(k_x3, (B3, latent_dim), jnp.float32)
    out3 = jax.block_until_ready(decoder_forward(x3, w, b))
    ref3 = jnp.maximum(x3 @ w + b, 0.0).reshape(B3, 7, 7, 32)
    assert out3.shape == (B3, 7, 7, 32), out3.shape
    assert jnp.allclose(out3, ref3, atol=1e-5, rtol=1e-5), "mid-batch mismatch vs reference"

    print("KERNEL_OK")
</pallas_src>

<mosaic_0001>
module attributes {stable_mosaic.version = 11 : i64} {
  func.func @decoder_kernel(%arg0: i32, %arg1: memref<8x8xf32, #tpu.memory_space<vmem>>, %arg2: memref<8x1568xf32, #tpu.memory_space<vmem>>, %arg3: memref<1x1568xf32, #tpu.memory_space<vmem>>, %arg4: memref<8x1568xf32, #tpu.memory_space<vmem>>) attributes {dimension_semantics = [#tpu.dimension_semantics<parallel>], iteration_bounds = array<i64: 1>, scalar_prefetch = 0 : i64, scratch_operands = 0 : i64, tpu.core_type = #tpu.core_type<tc>, window_params = [{transform_indices = @transform_0, window_bounds = array<i64: 8, 8>}, {pipeline_mode = #tpu.pipeline_mode<synchronous>, transform_indices = @transform_1, window_bounds = array<i64: 8, 1568>}, {pipeline_mode = #tpu.pipeline_mode<synchronous>, transform_indices = @transform_2, window_bounds = array<i64: 1, 1568>}, {transform_indices = @transform_3, window_bounds = array<i64: 8, 1568>}]} {
    %c0 = arith.constant 0 : index
    %c0_0 = arith.constant 0 : index
    %0 = vector.load %arg1[%c0, %c0_0] : memref<8x8xf32, #tpu.memory_space<vmem>>, vector<8x8xf32>
    %c0_1 = arith.constant 0 : index
    %c0_2 = arith.constant 0 : index
    %1 = vector.load %arg2[%c0_1, %c0_2] : memref<8x1568xf32, #tpu.memory_space<vmem>>, vector<8x1568xf32>
    %cst = arith.constant dense<0.000000e+00> : vector<8x1568xf32>
    %2 = tpu.matmul %0, %1, %cst {dimension_numbers = #tpu.dot_dimension_numbers<[1], [0], [0], [1], [0, 0, 1, 1], [], []>} : vector<8x8xf32>, vector<8x1568xf32>, vector<8x1568xf32> -> vector<8x1568xf32>
    %c0_3 = arith.constant 0 : index
    %c0_4 = arith.constant 0 : index
    %3 = vector.load %arg3[%c0_3, %c0_4] : memref<1x1568xf32, #tpu.memory_space<vmem>>, vector<1x1568xf32>
    %4 = vector.broadcast %3 : vector<1x1568xf32> to vector<8x1568xf32>
    %5 = arith.addf %2, %4 : vector<8x1568xf32>
    %cst_5 = arith.constant 0.000000e+00 : f32
    %6 = vector.broadcast %cst_5 : f32 to vector<8x1568xf32>
    %7 = arith.maximumf %5, %6 : vector<8x1568xf32>
    %c0_6 = arith.constant 0 : index
    %c0_7 = arith.constant 0 : index
    %8 = vector.load %arg4[%c0_6, %c0_7] : memref<8x1568xf32, #tpu.memory_space<vmem>>, vector<8x1568xf32>
    tpu.vector_store %arg4[%c0_6, %c0_7], %7 {strides = array<i32>} : memref<8x1568xf32, #tpu.memory_space<vmem>>, vector<8x1568xf32>,
    return
  }
  func.func @transform_0(%arg0: i32) -> (i32, i32) {
    %c0_i32 = arith.constant 0 : i32
    %c0_i32_0 = arith.constant 0 : i32
    return %arg0, %c0_i32 : i32, i32
  }
  func.func @transform_1(%arg0: i32) -> (i32, i32) {
    %c0_i32 = arith.constant 0 : i32
    %c0_i32_0 = arith.constant 0 : i32
    %c0_i32_1 = arith.constant 0 : i32
    return %c0_i32, %c0_i32_0 : i32, i32
  }
  func.func @transform_2(%arg0: i32) -> (i32, i32) {
    %c0_i32 = arith.constant 0 : i32
    %c0_i32_0 = arith.constant 0 : i32
    %c0_i32_1 = arith.constant 0 : i32
    return %c0_i32, %c0_i32_0 : i32, i32
  }
  func.func @transform_3(%arg0: i32) -> (i32, i32) {
    %c0_i32 = arith.constant 0 : i32
    %c0_i32_0 = arith.constant 0 : i32
    return %arg0, %c0_i32 : i32, i32
  }
}

</mosaic_0001>

<llo_original>
// kernel: tpu_custom_call.1
$region0: #{tpu_custom_call.1}
  #allocation0 [shape = 'u32[]', space=smem, size = 0x4, offset = 0x4, fixed_abs, tag = 'smem constant byte address 0x4 - core index']
  #allocation1 [shape = 'u32[144,128]{1,0:T(1,128)}', space=vmem, size = 0x12000, scoped, tag = 'internal scratch']
  %s0 = inlined_call_operand.hbm [shape: f32[2,8], index: 0, kind: input, shape index: {}]
  %s1 = inlined_call_operand.hbm [shape: f32[8,1568], index: 1, kind: input, shape index: {}]
  %s2 = inlined_call_operand.hbm [shape: f32[1,1568], index: 2, kind: input, shape index: {}]
  %s3 = inlined_call_operand.hbm [shape: f32[2,1568], index: 3, kind: output, shape index: {}]
  %s4 = sld [smem:[#allocation0]]
  $region34: #{tpu_custom_call.1} parent=0
    _
  %s6 = ssub.s32 1, %s4
  %s7 = scalar_select 0, %s6, %s4
  $region1: #{tpu_custom_call.1} parent=0
    #allocation2 [shape = 'u8[4096]{0}', space=vmem, size = 0x1000, scoped, tag = 'input window, operand 0, single buffered']
    #allocation3 [shape = 's32[1]{0}', space=sflag, size = 0x4, scoped, tag = 'scoped memory for tpu_custom_call.1']
    #allocation4 [shape = 's32[1]{0}', space=sflag, size = 0x4, scoped, tag = 'scoped memory for tpu_custom_call.1']
    #allocation5 [shape = 'u8[53248]{0}', space=vmem, size = 0xd000, scoped, tag = 'input window, operand 1, single buffered']
    #allocation6 [shape = 's32[1]{0}', space=sflag, size = 0x4, scoped, tag = 'scoped memory for tpu_custom_call.1']
    #allocation7 [shape = 'u8[6656]{0}', space=vmem, size = 0x1c00, scoped, tag = 'input window, operand 2, single buffered']
    #allocation8 [shape = 'u8[53248]{0}', space=vmem, size = 0xd000, scoped, tag = 'output window, operand 0, single buffered']
    %8 = vsyncpa [#allocation3], 0
    %9 = vsyncpa [#allocation6], 0
    %10 = vsyncpa [#allocation4], 0
    // Predicated region
    $region2: #{tpu_custom_call.1} parent=1 // pred_check
      _
    $region3: #{tpu_custom_call.1} parent=1 // pred_check_branch
      %12 = sbr.rel (0) target = $region5
    $region4: #{tpu_custom_call.1} parent=1 // pred_region
      %s14 = ssub.s32 128, 32
      %15 = vsyncadd [#allocation3], %s14
      %s16 = sshll.u32 [#allocation2], 4
      %s17 = int_to_ptr.vmem [resolvable:$true] %s16
      %22 = dma.hbm_to_vmem [thread:$0]  %s0, 32, %s17, [#allocation3], 32, 32, 2
    $region5: #{tpu_custom_call.1} parent=1 // pred_fallthru
      _
    // Predicated region
    $region6: #{tpu_custom_call.1} parent=1 // pred_check
      _
    $region7: #{tpu_custom_call.1} parent=1 // pred_check_branch
      %24 = sbr.rel (0) target = $region9
    $region8: #{tpu_custom_call.1} parent=1 // pred_region
      %s26 = ssub.s32 1664, 1664
      %27 = vsyncadd [#allocation6], %s26
      %s29 = sshll.u32 [#allocation5], 4
      %s30 = int_to_ptr.vmem [resolvable:$true] %s29
      %32 = dma.hbm_to_vmem [thread:$0]  %s1, 1664, %s30, [#allocation6]
    $region9: #{tpu_custom_call.1} parent=1 // pred_fallthru
      _
    // Predicated region
    $region10: #{tpu_custom_call.1} parent=1 // pred_check
      _
    $region11: #{tpu_custom_call.1} parent=1 // pred_check_branch
      %34 = sbr.rel (0) target = $region13
    $region12: #{tpu_custom_call.1} parent=1 // pred_region
      %s36 = ssub.s32 208, 208
      %37 = vsyncadd [#allocation6], %s36
      %s39 = sshll.u32 [#allocation7], 4
      %s40 = int_to_ptr.vmem [resolvable:$true] %s39
      %42 = dma.hbm_to_vmem [thread:$0]  %s2, 208, %s40, [#allocation6]
    $region13: #{tpu_custom_call.1} parent=1 // pred_fallthru
      _
    // Predicated region
    $region14: #{tpu_custom_call.1} parent=1 // pred_check
      _
    $region15: #{tpu_custom_call.1} parent=1 // pred_check_branch
      %44 = sbr.rel (0) target = $region17
    $region16: #{tpu_custom_call.1} parent=1 // pred_region
      %45 = dma.done [#allocation3], 128
    $region17: #{tpu_custom_call.1} parent=1 // pred_fallthru
      _
    // Predicated region
    $region18: #{tpu_custom_call.1} parent=1 // pred_check
      _
    $region19: #{tpu_custom_call.1} parent=1 // pred_check_branch
      %47 = sbr.rel (0) target = $region21
    $region20: #{tpu_custom_call.1} parent=1 // pred_region
      %48 = dma.done [#allocation6], 1664
    $region21: #{tpu_custom_call.1} parent=1 // pred_fallthru
      _
    // Predicated region
    $region22: #{tpu_custom_call.1} parent=1 // pred_check
      _
    $region23: #{tpu_custom_call.1} parent=1 // pred_check_branch
      %50 = sbr.rel (0) target = $region25
    $region24: #{tpu_custom_call.1} parent=1 // pred_region
      %51 = dma.done [#allocation6], 208
    $region25: #{tpu_custom_call.1} parent=1 // pred_fallthru
      _
    %v52 = vld [vmem:[#allocation2] sm:$0xff]
    %v53 = vld [vmem:[#allocation5] sm:$0xff]
    %v54 = vld [vmem:[#allocation5 + $0x8] sm:$0xff]
    %v55 = vld [vmem:[#allocation5 + $0x10] sm:$0xff]
    %v56 = vld [vmem:[#allocation5 + $0x18] sm:$0xff]
    %v57 = vld [vmem:[#allocation5 + $0x20] sm:$0xff]
    %v58 = vld [vmem:[#allocation5 + $0x28] sm:$0xff]
    %v59 = vld [vmem:[#allocation5 + $0x30] sm:$0xff]
    %v60 = vld [vmem:[#allocation5 + $0x38] sm:$0xff]
    %v61 = vld [vmem:[#allocation5 + $0x40] sm:$0xff]
    %v62 = vld [vmem:[#allocation5 + $0x48] sm:$0xff]
    %v63 = vld [vmem:[#allocation5 + $0x50] sm:$0xff]
    %v64 = vld [vmem:[#allocation5 + $0x58] sm:$0xff]
    %v65 = vld [vmem:[#allocation5 + $0x60] sm:$0xff]
    %v66 = vld [vmem:[#allocation7] sm:$0xff]
    %v67 = vld [vmem:[#allocation7 + $0x8] sm:$0x1f]
    %v70 = vlaneseq
    %v71 = vshrl.u32 %v70, 7
    %v72 = vsub.s32 0, %v71
    %v73 = vrot.slane %v66, %v72
    %v74 = vlaneseq
    %v75 = vshrl.u32 %v74, 7
    %v76 = vsub.s32 1, %v75
    %v77 = vrot.slane %v66, %v76
    %v78 = vlaneseq
    %v79 = vshrl.u32 %v78, 7
    %v80 = vsub.s32 2, %v79
    %v81 = vrot.slane %v66, %v80
    %v82 = vlaneseq
    %v83 = vshrl.u32 %v82, 7
    %v84 = vsub.s32 3, %v83
    %v85 = vrot.slane %v66, %v84
    %v86 = vlaneseq
    %v87 = vshrl.u32 %v86, 7
    %v88 = vsub.s32 4, %v87
    %v89 = vrot.slane %v66, %v88
    %v90 = vlaneseq
    %v91 = vshrl.u32 %v90, 7
    %v92 = vsub.s32 5, %v91
    %v93 = vrot.slane %v66, %v92
    %v94 = vlaneseq
    %v95 = vshrl.u32 %v94, 7
    %v96 = vsub.s32 6, %v95
    %v97 = vrot.slane %v66, %v96
    %v98 = vlaneseq
    %v99 = vshrl.u32 %v98, 7
    %v100 = vsub.s32 7, %v99
    %v101 = vrot.slane %v66, %v100
    %v102 = vlaneseq
    %v103 = vshrl.u32 %v102, 7
    %v104 = vsub.s32 0, %v103
    %v105 = vrot.slane %v67, %v104
    %v106 = vlaneseq
    %v107 = vshrl.u32 %v106, 7
    %v108 = vsub.s32 1, %v107
    %v109 = vrot.slane %v67, %v108
    %v110 = vlaneseq
    %v111 = vshrl.u32 %v110, 7
    %v112 = vsub.s32 2, %v111
    %v113 = vrot.slane %v67, %v112
    %v114 = vlaneseq
    %v115 = vshrl.u32 %v114, 7
    %v116 = vsub.s32 3, %v115
    %v117 = vrot.slane %v67, %v116
    %v118 = vlaneseq
    %v119 = vshrl.u32 %v118, 7
    %v120 = vsub.s32 4, %v119
    %v121 = vrot.slane %v67, %v120
    %vm135 = vcmask 64512
    %v137 = vsel %vm135, %v52, 0
    %139 = vmatprep.subr.mxu0 %v54
    %140 = vmatpush1.msra.mxu0 %v53
    %141 = vmatprep.subr.mxu0 0.0
    %142 = vmatpush1.msra.mxu0 0.0
    %143 = vmatprep.subr.mxu0 0.0
    %144 = vmatpush1.msra.mxu0 0.0
    %145 = vmatprep.subr.mxu0 0.0
    %146 = vmatpush1.msra.mxu0 0.0
    %147 = vmatprep.subr.mxu0 0.0
    %148 = vmatpush1.msra.mxu0 0.0
    %149 = vmatprep.subr.mxu0 0.0
    %150 = vmatpush1.msra.mxu0 0.0
    %151 = vmatprep.subr.mxu0 0.0
    %152 = vmatpush1.msra.mxu0 0.0
    %153 = vmatprep.subr.mxu0 0.0
    %154 = vmatpush1.msra.mxu0 0.0
    %155 = vmatprep.subr.mxu0 0.0
    %156 = vmatpush1.msra.mxu0 0.0
    %157 = vmatprep.subr.mxu0 0.0
    %158 = vmatpush1.msra.mxu0 0.0
    %159 = vmatprep.subr.mxu0 0.0
    %160 = vmatpush1.msra.mxu0 0.0
    %161 = vmatprep.subr.mxu0 0.0
    %162 = vmatpush1.msra.mxu0 0.0
    %163 = vmatprep.subr.mxu0 0.0
    %164 = vmatpush1.msra.mxu0 0.0
    %165 = vmatprep.subr.mxu0 0.0
    %166 = vmatpush1.msra.mxu0 0.0
    %167 = vmatprep.subr.mxu0 0.0
    %168 = vmatpush1.msra.mxu0 0.0
    %169 = vmatprep.subr.mxu0 0.0
    %170 = vmatpush1.msra.mxu0 0.0
    %171 = vmatprep.subr.mxu0 0.0
    %172 = vmatpush1.msra.mxu0 0.0
    %173 = vmatprep.subr.mxu0 0.0
    %174 = vmatpush1.msra.mxu0 0.0
    %175 = vmatprep.subr.mxu0 0.0
    %176 = vmatpush1.msra.mxu0 0.0
    %177 = vmatprep.subr.mxu0 0.0
    %178 = vmatpush1.msra.mxu0 0.0
    %179 = vmatprep.subr.mxu0 0.0
    %180 = vmatpush1.msra.mxu0 0.0
    %181 = vmatprep.subr.mxu0 0.0
    %182 = vmatpush1.msra.mxu0 0.0
    %183 = vmatprep.subr.mxu0 0.0
    %184 = vmatpush1.msra.mxu0 0.0
    %185 = vmatprep.subr.mxu0 0.0
    %186 = vmatpush1.msra.mxu0 0.0
    %187 = vmatprep.subr.mxu0 0.0
    %188 = vmatpush1.msra.mxu0 0.0
    %189 = vmatprep.subr.mxu0 0.0
    %190 = vmatpush1.msra.mxu0 0.0
    %191 = vmatprep.subr.mxu0 0.0
    %192 = vmatpush1.msra.mxu0 0.0
    %193 = vmatprep.subr.mxu0 0.0
    %194 = vmatpush1.msra.mxu0 0.0
    %195 = vmatprep.subr.mxu0 0.0
    %196 = vmatpush1.msra.mxu0 0.0
    %197 = vmatprep.subr.mxu0 0.0
    %198 = vmatpush1.msra.mxu0 0.0
    %199 = vmatprep.subr.mxu0 0.0
    %200 = vmatpush1.msra.mxu0 0.0
    %201 = vmatprep.subr.mxu0 0.0
    %202 = vmatpush1.msra.mxu0 0.0
    %203 = vmatprep.mubr.f32.mxu0 0.0
    %204 = vmatmul.mubr.f32.gmra.mrb[0].mxu0 %v137
    %v205 = vpop.f32.mrb[0].mxu0
    %v206 = vadd.f32 %v73, %v205
    %v207 = vpop.f32.mrb[0].mxu0
    %v208 = vadd.f32 %v77, %v207
    %209 = vdwg.mxu0
    %210 = vmatprep.subr.mxu0 %v56
    %211 = vmatpush1.msra.mxu0 %v55
    %212 = vmatprep.subr.mxu0 0.0
    %213 = vmatpush1.msra.mxu0 0.0
    %214 = vmatprep.subr.mxu0 0.0
    %215 = vmatpush1.msra.mxu0 0.0
    %216 = vmatprep.subr.mxu0 0.0
    %217 = vmatpush1.msra.mxu0 0.0
    %218 = vmatprep.subr.mxu0 0.0
    %219 = vmatpush1.msra.mxu0 0.0
    %220 = vmatprep.subr.mxu0 0.0
    %221 = vmatpush1.msra.mxu0 0.0
    %222 = vmatprep.subr.mxu0 0.0
    %223 = vmatpush1.msra.mxu0 0.0
    %224 = vmatprep.subr.mxu0 0.0
    %225 = vmatpush1.msra.mxu0 0.0
    %226 = vmatprep.subr.mxu0 0.0
    %227 = vmatpush1.msra.mxu0 0.0
    %228 = vmatprep.subr.mxu0 0.0
    %229 = vmatpush1.msra.mxu0 0.0
    %230 = vmatprep.subr.mxu0 0.0
    %231 = vmatpush1.msra.mxu0 0.0
    %232 = vmatprep.subr.mxu0 0.0
    %233 = vmatpush1.msra.mxu0 0.0
    %234 = vmatprep.subr.mxu0 0.0
    %235 = vmatpush1.msra.mxu0 0.0
    %236 = vmatprep.subr.mxu0 0.0
    %237 = vmatpush1.msra.mxu0 0.0
    %238 = vmatprep.subr.mxu0 0.0
    %239 = vmatpush1.msra.mxu0 0.0
    %240 = vmatprep.subr.mxu0 0.0
    %241 = vmatpush1.msra.mxu0 0.0
    %242 = vmatprep.subr.mxu0 0.0
    %243 = vmatpush1.msra.mxu0 0.0
    %244 = vmatprep.subr.mxu0 0.0
    %245 = vmatpush1.msra.mxu0 0.0
    %246 = vmatprep.subr.mxu0 0.0
    %247 = vmatpush1.msra.mxu0 0.0
    %248 = vmatprep.subr.mxu0 0.0
    %249 = vmatpush1.msra.mxu0 0.0
    %250 = vmatprep.subr.mxu0 0.0
    %251 = vmatpush1.msra.mxu0 0.0
    %252 = vmatprep.subr.mxu0 0.0
    %253 = vmatpush1.msra.mxu0 0.0
    %254 = vmatprep.subr.mxu0 0.0
    %255 = vmatpush1.msra.mxu0 0.0
    %256 = vmatprep.subr.mxu0 0.0
    %257 = vmatpush1.msra.mxu0 0.0
    %258 = vmatprep.subr.mxu0 0.0
    %259 = vmatpush1.msra.mxu0 0.0
    %260 = vmatprep.subr.mxu0 0.0
    %261 = vmatpush1.msra.mxu0 0.0
    %262 = vmatprep.subr.mxu0 0.0
    %263 = vmatpush1.msra.mxu0 0.0
    %264 = vmatprep.subr.mxu0 0.0
    %265 = vmatpush1.msra.mxu0 0.0
    %266 = vmatprep.subr.mxu0 0.0
    %267 = vmatpush1.msra.mxu0 0.0
    %268 = vmatprep.subr.mxu0 0.0
    %269 = vmatpush1.msra.mxu0 0.0
    %270 = vmatprep.subr.mxu0 0.0
    %271 = vmatpush1.msra.mxu0 0.0
    %272 = vmatprep.subr.mxu0 0.0
    %273 = vmatpush1.msra.mxu0 0.0
    %274 = vmatprep.mubr.f32.mxu0 0.0
    %275 = vmatmul.mubr.f32.gmra.mrb[0].mxu0 %v137
    %v276 = vpop.f32.mrb[0].mxu0
    %v277 = vadd.f32 %v81, %v276
    %v278 = vpop.f32.mrb[0].mxu0
    %v279 = vadd.f32 %v85, %v278
    %280 = vdwg.mxu0
    %281 = vmatprep.subr.mxu0 %v58
    %282 = vmatpush1.msra.mxu0 %v57
    %283 = vmatprep.subr.mxu0 0.0
    %284 = vmatpush1.msra.mxu0 0.0
    %285 = vmatprep.subr.mxu0 0.0
    %286 = vmatpush1.msra.mxu0 0.0
    %287 = vmatprep.subr.mxu0 0.0
    %288 = vmatpush1.msra.mxu0 0.0
    %289 = vmatprep.subr.mxu0 0.0
    %290 = vmatpush1.msra.mxu0 0.0
    %291 = vmatprep.subr.mxu0 0.0
    %292 = vmatpush1.msra.mxu0 0.0
    %293 = vmatprep.subr.mxu0 0.0
    %294 = vmatpush1.msra.mxu0 0.0
    %295 = vmatprep.subr.mxu0 0.0
    %296 = vmatpush1.msra.mxu0 0.0
    %297 = vmatprep.subr.mxu0 0.0
    %298 = vmatpush1.msra.mxu0 0.0
    %299 = vmatprep.subr.mxu0 0.0
    %300 = vmatpush1.msra.mxu0 0.0
    %301 = vmatprep.subr.mxu0 0.0
    %302 = vmatpush1.msra.mxu0 0.0
    %303 = vmatprep.subr.mxu0 0.0
    %304 = vmatpush1.msra.mxu0 0.0
    %305 = vmatprep.subr.mxu0 0.0
    %306 = vmatpush1.msra.mxu0 0.0
    %307 = vmatprep.subr.mxu0 0.0
    %308 = vmatpush1.msra.mxu0 0.0
    %309 = vmatprep.subr.mxu0 0.0
    %310 = vmatpush1.msra.mxu0 0.0
    %311 = vmatprep.subr.mxu0 0.0
    %312 = vmatpush1.msra.mxu0 0.0
    %313 = vmatprep.subr.mxu0 0.0
    %314 = vmatpush1.msra.mxu0 0.0
    %315 = vmatprep.subr.mxu0 0.0
    %316 = vmatpush1.msra.mxu0 0.0
    %317 = vmatprep.subr.mxu0 0.0
    %318 = vmatpush1.msra.mxu0 0.0
    %319 = vmatprep.subr.mxu0 0.0
    %320 = vmatpush1.msra.mxu0 0.0
    %321 = vmatprep.subr.mxu0 0.0
    %322 = vmatpush1.msra.mxu0 0.0
    %323 = vmatprep.subr.mxu0 0.0
    %324 = vmatpush1.msra.mxu0 0.0
    %325 = vmatprep.subr.mxu0 0.0
    %326 = vmatpush1.msra.mxu0 0.0
    %327 = vmatprep.subr.mxu0 0.0
    %328 = vmatpush1.msra.mxu0 0.0
    %329 = vmatprep.subr.mxu0 0.0
    %330 = vmatpush1.msra.mxu0 0.0
    %331 = vmatprep.subr.mxu0 0.0
    %332 = vmatpush1.msra.mxu0 0.0
    %333 = vmatprep.subr.mxu0 0.0
    %334 = vmatpush1.msra.mxu0 0.0
    %335 = vmatprep.subr.mxu0 0.0
    %336 = vmatpush1.msra.mxu0 0.0
    %337 = vmatprep.subr.mxu0 0.0
    %338 = vmatpush1.msra.mxu0 0.0
    %339 = vmatprep.subr.mxu0 0.0
    %340 = vmatpush1.msra.mxu0 0.0
    %341 = vmatprep.subr.mxu0 0.0
    %342 = vmatpush1.msra.mxu0 0.0
    %343 = vmatprep.subr.mxu0 0.0
    %344 = vmatpush1.msra.mxu0 0.0
    %345 = vmatprep.mubr.f32.mxu0 0.0
    %346 = vmatmul.mubr.f32.gmra.mrb[0].mxu0 %v137
    %v347 = vpop.f32.mrb[0].mxu0
    %v348 = vadd.f32 %v89, %v347
    %v349 = vpop.f32.mrb[0].mxu0
    %v350 = vadd.f32 %v93, %v349
    %351 = vdwg.mxu0
    %352 = vmatprep.subr.mxu0 %v60
    %353 = vmatpush1.msra.mxu0 %v59
    %354 = vmatprep.subr.mxu0 0.0
    %355 = vmatpush1.msra.mxu0 0.0
    %356 = vmatprep.subr.mxu0 0.0
    %357 = vmatpush1.msra.mxu0 0.0
    %358 = vmatprep.subr.mxu0 0.0
    %359 = vmatpush1.msra.mxu0 0.0
    %360 = vmatprep.subr.mxu0 0.0
    %361 = vmatpush1.msra.mxu0 0.0
    %362 = vmatprep.subr.mxu0 0.0
    %363 = vmatpush1.msra.mxu0 0.0
    %364 = vmatprep.subr.mxu0 0.0
    %365 = vmatpush1.msra.mxu0 0.0
    %366 = vmatprep.subr.mxu0 0.0
    %367 = vmatpush1.msra.mxu0 0.0
    %368 = vmatprep.subr.mxu0 0.0
    %369 = vmatpush1.msra.mxu0 0.0
    %370 = vmatprep.subr.mxu0 0.0
    %371 = vmatpush1.msra.mxu0 0.0
    %372 = vmatprep.subr.mxu0 0.0
    %373 = vmatpush1.msra.mxu0 0.0
    %374 = vmatprep.subr.mxu0 0.0
    %375 = vmatpush1.msra.mxu0 0.0
    %376 = vmatprep.subr.mxu0 0.0
    %377 = vmatpush1.msra.mxu0 0.0
    %378 = vmatprep.subr.mxu0 0.0
    %379 = vmatpush1.msra.mxu0 0.0
    %380 = vmatprep.subr.mxu0 0.0
    %381 = vmatpush1.msra.mxu0 0.0
    %382 = vmatprep.subr.mxu0 0.0
    %383 = vmatpush1.msra.mxu0 0.0
    %384 = vmatprep.subr.mxu0 0.0
    %385 = vmatpush1.msra.mxu0 0.0
    %386 = vmatprep.subr.mxu0 0.0
    %387 = vmatpush1.msra.mxu0 0.0
    %388 = vmatprep.subr.mxu0 0.0
    %389 = vmatpush1.msra.mxu0 0.0
    %390 = vmatprep.subr.mxu0 0.0
    %391 = vmatpush1.msra.mxu0 0.0
    %392 = vmatprep.subr.mxu0 0.0
    %393 = vmatpush1.msra.mxu0 0.0
    %394 = vmatprep.subr.mxu0 0.0
    %395 = vmatpush1.msra.mxu0 0.0
    %396 = vmatprep.subr.mxu0 0.0
    %397 = vmatpush1.msra.mxu0 0.0
    %398 = vmatprep.subr.mxu0 0.0
    %399 = vmatpush1.msra.mxu0 0.0
    %400 = vmatprep.subr.mxu0 0.0
    %401 = vmatpush1.msra.mxu0 0.0
    %402 = vmatprep.subr.mxu0 0.0
    %403 = vmatpush1.msra.mxu0 0.0
    %404 = vmatprep.subr.mxu0 0.0
    %405 = vmatpush1.msra.mxu0 0.0
    %406 = vmatprep.subr.mxu0 0.0
    %407 = vmatpush1.msra.mxu0 0.0
    %408 = vmatprep.subr.mxu0 0.0
    %409 = vmatpush1.msra.mxu0 0.0
    %410 = vmatprep.subr.mxu0 0.0
    %411 = vmatpush1.msra.mxu0 0.0
    %412 = vmatprep.subr.mxu0 0.0
    %413 = vmatpush1.msra.mxu0 0.0
    %414 = vmatprep.subr.mxu0 0.0
    %415 = vmatpush1.msra.mxu0 0.0
    %416 = vmatprep.mubr.f32.mxu0 0.0
    %417 = vmatmul.mubr.f32.gmra.mrb[0].mxu0 %v137
    %v418 = vpop.f32.mrb[0].mxu0
    %v419 = vadd.f32 %v97, %v418
    %v420 = vpop.f32.mrb[0].mxu0
    %v421 = vadd.f32 %v101, %v420
    %422 = vdwg.mxu0
    %423 = vmatprep.subr.mxu0 %v62
    %424 = vmatpush1.msra.mxu0 %v61
    %425 = vmatprep.subr.mxu0 0.0
    %426 = vmatpush1.msra.mxu0 0.0
    %427 = vmatprep.subr.mxu0 0.0
    %428 = vmatpush1.msra.mxu0 0.0
    %429 = vmatprep.subr.mxu0 0.0
    %430 = vmatpush1.msra.mxu0 0.0
    %431 = vmatprep.subr.mxu0 0.0
    %432 = vmatpush1.msra.mxu0 0.0
    %433 = vmatprep.subr.mxu0 0.0
    %434 = vmatpush1.msra.mxu0 0.0
    %435 = vmatprep.subr.mxu0 0.0
    %436 = vmatpush1.msra.mxu0 0.0
    %437 = vmatprep.subr.mxu0 0.0
    %438 = vmatpush1.msra.mxu0 0.0
    %439 = vmatprep.subr.mxu0 0.0
    %440 = vmatpush1.msra.mxu0 0.0
    %441 = vmatprep.subr.mxu0 0.0
    %442 = vmatpush1.msra.mxu0 0.0
    %443 = vmatprep.subr.mxu0 0.0
    %444 = vmatpush1.msra.mxu0 0.0
    %445 = vmatprep.subr.mxu0 0.0
    %446 = vmatpush1.msra.mxu0 0.0
    %447 = vmatprep.subr.mxu0 0.0
    %448 = vmatpush1.msra.mxu0 0.0
    %449 = vmatprep.subr.mxu0 0.0
    %450 = vmatpush1.msra.mxu0 0.0
    %451 = vmatprep.subr.mxu0 0.0
    %452 = vmatpush1.msra.mxu0 0.0
    %453 = vmatprep.subr.mxu0 0.0
    %454 = vmatpush1.msra.mxu0 0.0
    %455 = vmatprep.subr.mxu0 0.0
    %456 = vmatpush1.msra.mxu0 0.0
    %457 = vmatprep.subr.mxu0 0.0
    %458 = vmatpush1.msra.mxu0 0.0
    %459 = vmatprep.subr.mxu0 0.0
    %460 = vmatpush1.msra.mxu0 0.0
    %461 = vmatprep.subr.mxu0 0.0
    %462 = vmatpush1.msra.mxu0 0.0
    %463 = vmatprep.subr.mxu0 0.0
    %464 = vmatpush1.msra.mxu0 0.0
    %465 = vmatprep.subr.mxu0 0.0
    %466 = vmatpush1.msra.mxu0 0.0
    %467 = vmatprep.subr.mxu0 0.0
    %468 = vmatpush1.msra.mxu0 0.0
    %469 = vmatprep.subr.mxu0 0.0
    %470 = vmatpush1.msra.mxu0 0.0
    %471 = vmatprep.subr.mxu0 0.0
    %472 = vmatpush1.msra.mxu0 0.0
    %473 = vmatprep.subr.mxu0 0.0
    %474 = vmatpush1.msra.mxu0 0.0
    %475 = vmatprep.subr.mxu0 0.0
    %476 = vmatpush1.msra.mxu0 0.0
    %477 = vmatprep.subr.mxu0 0.0
    %478 = vmatpush1.msra.mxu0 0.0
    %479 = vmatprep.subr.mxu0 0.0
    %480 = vmatpush1.msra.mxu0 0.0
    %481 = vmatprep.subr.mxu0 0.0
    %482 = vmatpush1.msra.mxu0 0.0
    %483 = vmatprep.subr.mxu0 0.0
    %484 = vmatpush1.msra.mxu0 0.0
    %485 = vmatprep.subr.mxu0 0.0
    %486 = vmatpush1.msra.mxu0 0.0
    %487 = vmatprep.mubr.f32.mxu0 0.0
    %488 = vmatmul.mubr.f32.gmra.mrb[0].mxu0 %v137
    %v489 = vpop.f32.mrb[0].mxu0
    %v490 = vadd.f32 %v105, %v489
    %v491 = vpop.f32.mrb[0].mxu0
    %v492 = vadd.f32 %v109, %v491
    %493 = vdwg.mxu0
    %494 = vmatprep.subr.mxu0 %v64
    %495 = vmatpush1.msra.mxu0 %v63
    %496 = vmatprep.subr.mxu0 0.0
    %497 = vmatpush1.msra.mxu0 0.0
    %498 = vmatprep.subr.mxu0 0.0
    %499 = vmatpush1.msra.mxu0 0.0
    %500 = vmatprep.subr.mxu0 0.0
    %501 = vmatpush1.msra.mxu0 0.0
    %502 = vmatprep.subr.mxu0 0.0
    %503 = vmatpush1.msra.mxu0 0.0
    %504 = vmatprep.subr.mxu0 0.0
    %505 = vmatpush1.msra.mxu0 0.0
    %506 = vmatprep.subr.mxu0 0.0
    %507 = vmatpush1.msra.mxu0 0.0
    %508 = vmatprep.subr.mxu0 0.0
    %509 = vmatpush1.msra.mxu0 0.0
    %510 = vmatprep.subr.mxu0 0.0
    %511 = vmatpush1.msra.mxu0 0.0
    %512 = vmatprep.subr.mxu0 0.0
    %513 = vmatpush1.msra.mxu0 0.0
    %514 = vmatprep.subr.mxu0 0.0
    %515 = vmatpush1.msra.mxu0 0.0
    %516 = vmatprep.subr.mxu0 0.0
    %517 = vmatpush1.msra.mxu0 0.0
    %518 = vmatprep.subr.mxu0 0.0
    %519 = vmatpush1.msra.mxu0 0.0
    %520 = vmatprep.subr.mxu0 0.0
    %521 = vmatpush1.msra.mxu0 0.0
    %522 = vmatprep.subr.mxu0 0.0
    %523 = vmatpush1.msra.mxu0 0.0
    %524 = vmatprep.subr.mxu0 0.0
    %525 = vmatpush1.msra.mxu0 0.0
    %526 = vmatprep.subr.mxu0 0.0
    %527 = vmatpush1.msra.mxu0 0.0
    %528 = vmatprep.subr.mxu0 0.0
    %529 = vmatpush1.msra.mxu0 0.0
    %530 = vmatprep.subr.mxu0 0.0
    %531 = vmatpush1.msra.mxu0 0.0
    %532 = vmatprep.subr.mxu0 0.0
    %533 = vmatpush1.msra.mxu0 0.0
    %534 = vmatprep.subr.mxu0 0.0
    %535 = vmatpush1.msra.mxu0 0.0
    %536 = vmatprep.subr.mxu0 0.0
    %537 = vmatpush1.msra.mxu0 0.0
    %538 = vmatprep.subr.mxu0 0.0
    %539 = vmatpush1.msra.mxu0 0.0
    %540 = vmatprep.subr.mxu0 0.0
    %541 = vmatpush1.msra.mxu0 0.0
    %542 = vmatprep.subr.mxu0 0.0
    %543 = vmatpush1.msra.mxu0 0.0
    %544 = vmatprep.subr.mxu0 0.0
    %545 = vmatpush1.msra.mxu0 0.0
    %546 = vmatprep.subr.mxu0 0.0
    %547 = vmatpush1.msra.mxu0 0.0
    %548 = vmatprep.subr.mxu0 0.0
    %549 = vmatpush1.msra.mxu0 0.0
    %550 = vmatprep.subr.mxu0 0.0
    %551 = vmatpush1.msra.mxu0 0.0
    %552 = vmatprep.subr.mxu0 0.0
    %553 = vmatpush1.msra.mxu0 0.0
    %554 = vmatprep.subr.mxu0 0.0
    %555 = vmatpush1.msra.mxu0 0.0
    %556 = vmatprep.subr.mxu0 0.0
    %557 = vmatpush1.msra.mxu0 0.0
    %558 = vmatprep.mubr.f32.mxu0 0.0
    %559 = vmatmul.mubr.f32.gmra.mrb[0].mxu0 %v137
    %v560 = vpop.f32.mrb[0].mxu0
    %v561 = vadd.f32 %v113, %v560
    %v562 = vpop.f32.mrb[0].mxu0
    %v563 = vadd.f32 %v117, %v562
    %564 = vdwg.mxu0
    %565 = vmatprep.subr.mxu0 0.0
    %566 = vmatpush1.msra.mxu0 %v65
    %567 = vmatprep.subr.mxu0 0.0
    %568 = vmatpush1.msra.mxu0 0.0
    %569 = vmatprep.subr.mxu0 0.0
    %570 = vmatpush1.msra.mxu0 0.0
    %571 = vmatprep.subr.mxu0 0.0
    %572 = vmatpush1.msra.mxu0 0.0
    %573 = vmatprep.subr.mxu0 0.0
    %574 = vmatpush1.msra.mxu0 0.0
    %575 = vmatprep.subr.mxu0 0.0
    %576 = vmatpush1.msra.mxu0 0.0
    %577 = vmatprep.subr.mxu0 0.0
    %578 = vmatpush1.msra.mxu0 0.0
    %579 = vmatprep.subr.mxu0 0.0
    %580 = vmatpush1.msra.mxu0 0.0
    %581 = vmatprep.subr.mxu0 0.0
    %582 = vmatpush1.msra.mxu0 0.0
    %583 = vmatprep.subr.mxu0 0.0
    %584 = vmatpush1.msra.mxu0 0.0
    %585 = vmatprep.subr.mxu0 0.0
    %586 = vmatpush1.msra.mxu0 0.0
    %587 = vmatprep.subr.mxu0 0.0
    %588 = vmatpush1.msra.mxu0 0.0
    %589 = vmatprep.subr.mxu0 0.0
    %590 = vmatpush1.msra.mxu0 0.0
    %591 = vmatprep.subr.mxu0 0.0
    %592 = vmatpush1.msra.mxu0 0.0
    %593 = vmatprep.subr.mxu0 0.0
    %594 = vmatpush1.msra.mxu0 0.0
    %595 = vmatprep.subr.mxu0 0.0
    %596 = vmatpush1.msra.mxu0 0.0
    %597 = vmatprep.subr.mxu0 0.0
    %598 = vmatpush1.msra.mxu0 0.0
    %599 = vmatprep.subr.mxu0 0.0
    %600 = vmatpush1.msra.mxu0 0.0
    %601 = vmatprep.subr.mxu0 0.0
    %602 = vmatpush1.msra.mxu0 0.0
    %603 = vmatprep.subr.mxu0 0.0
    %604 = vmatpush1.msra.mxu0 0.0
    %605 = vmatprep.subr.mxu0 0.0
    %606 = vmatpush1.msra.mxu0 0.0
    %607 = vmatprep.subr.mxu0 0.0
    %608 = vmatpush1.msra.mxu0 0.0
    %609 = vmatprep.subr.mxu0 0.0
    %610 = vmatpush1.msra.mxu0 0.0
    %611 = vmatprep.subr.mxu0 0.0
    %612 = vmatpush1.msra.mxu0 0.0
    %613 = vmatprep.subr.mxu0 0.0
    %614 = vmatpush1.msra.mxu0 0.0
    %615 = vmatprep.subr.mxu0 0.0
    %616 = vmatpush1.msra.mxu0 0.0
    %617 = vmatprep.subr.mxu0 0.0
    %618 = vmatpush1.msra.mxu0 0.0
    %619 = vmatprep.subr.mxu0 0.0
    %620 = vmatpush1.msra.mxu0 0.0
    %621 = vmatprep.subr.mxu0 0.0
    %622 = vmatpush1.msra.mxu0 0.0
    %623 = vmatprep.subr.mxu0 0.0
    %624 = vmatpush1.msra.mxu0 0.0
    %625 = vmatprep.subr.mxu0 0.0
    %626 = vmatpush1.msra.mxu0 0.0
    %627 = vmatprep.subr.mxu0 0.0
    %628 = vmatpush1.msra.mxu0 0.0
    %629 = vmatprep.mubr.f32.mxu0 0.0
    %630 = vmatmul.mubr.f32.gmra.mrb[0].mxu0 %v137
    %v631 = vpop.f32.mrb[0].mxu0
    %v632 = vadd.f32 %v121, %v631
    %v633 = vpop.f32.mrb[0].mxu0
    %634 = vdwg.mxu0
    %v635 = vmax.f32 %v206, 0.0
    %v636 = vmax.f32 %v208, 0.0
    %v637 = vmax.f32 %v277, 0.0
    %v638 = vmax.f32 %v279, 0.0
    %v639 = vmax.f32 %v348, 0.0
    %v640 = vmax.f32 %v350, 0.0
    %v641 = vmax.f32 %v419, 0.0
    %v642 = vmax.f32 %v421, 0.0
    %v643 = vmax.f32 %v490, 0.0
    %v644 = vmax.f32 %v492, 0.0
    %v645 = vmax.f32 %v561, 0.0
    %v646 = vmax.f32 %v563, 0.0
    %v647 = vmax.f32 %v632, 0.0
    %v661 = vcombine.low %v635, %v636
    %v662 = vcombine.high %v635, %v636
    %v663 = vcombine.low %v637, %v638
    %v664 = vcombine.high %v637, %v638
    %v666 = vunpack.c.l.s4 1983009808
    %v667 = vunpack.c.0.s8 %v666
    %v668 = vlaneseq
    %v669 = vshrl.u32 %v668, 7
    %v670 = vsub.s32 %v667, %v669
    %v671 = vrot.slane %v661, %v670
    %v673 = vunpack.c.l.s4 1983009808
    %v674 = vunpack.c.0.s8 %v673
    %v675 = vlaneseq
    %v676 = vshrl.u32 %v675, 7
    %v677 = vsub.s32 %v674, %v676
    %v678 = vrot.slane %v662, %v677
    %v680 = vunpack.c.l.s4 1983009808
    %v681 = vunpack.c.0.s8 %v680
    %v682 = vlaneseq
    %v683 = vshrl.u32 %v682, 7
    %v684 = vsub.s32 %v681, %v683
    %v685 = vrot.slane %v663, %v684
    %v687 = vunpack.c.l.s4 1983009808
    %v688 = vunpack.c.0.s8 %v687
    %v689 = vlaneseq
    %v690 = vshrl.u32 %v689, 7
    %v691 = vsub.s32 %v688, %v690
    %v692 = vrot.slane %v664, %v691
    %v693 = vcombine.low %v671, %v685
    %v694 = vcombine.high %v671, %v685
    %v695 = vcombine.low %v678, %v692
    %v696 = vcombine.high %v678, %v692
    %v697 = vcombine.low %v639, %v640
    %v698 = vcombine.high %v639, %v640
    %v699 = vcombine.low %v641, %v642
    %v700 = vcombine.high %v641, %v642
    %v702 = vunpack.c.l.s4 1983009808
    %v703 = vunpack.c.0.s8 %v702
    %v704 = vlaneseq
    %v705 = vshrl.u32 %v704, 7
    %v706 = vsub.s32 %v703, %v705
    %v707 = vrot.slane %v697, %v706
    %v709 = vunpack.c.l.s4 1983009808
    %v710 = vunpack.c.0.s8 %v709
    %v711 = vlaneseq
    %v712 = vshrl.u32 %v711, 7
    %v713 = vsub.s32 %v710, %v712
    %v714 = vrot.slane %v698, %v713
    %v716 = vunpack.c.l.s4 1983009808
    %v717 = vunpack.c.0.s8 %v716
    %v718 = vlaneseq
    %v719 = vshrl.u32 %v718, 7
    %v720 = vsub.s32 %v717, %v719
    %v721 = vrot.slane %v699, %v720
    %v723 = vunpack.c.l.s4 1983009808
    %v724 = vunpack.c.0.s8 %v723
    %v725 = vlaneseq
    %v726 = vshrl.u32 %v725, 7
    %v727 = vsub.s32 %v724, %v726
    %v728 = vrot.slane %v700, %v727
    %v729 = vcombine.low %v707, %v721
    %v730 = vcombine.high %v707, %v721
    %v731 = vcombine.low %v714, %v728
    %v732 = vcombine.high %v714, %v728
    %v733 = vcombine.low %v643, %v644
    %v734 = vcombine.high %v643, %v644
    %v735 = vcombine.low %v645, %v646
    %v736 = vcombine.high %v645, %v646
    %v738 = vunpack.c.l.s4 1983009808
    %v739 = vunpack.c.0.s8 %v738
    %v740 = vlaneseq
    %v741 = vshrl.u32 %v740, 7
    %v742 = vsub.s32 %v739, %v741
    %v743 = vrot.slane %v733, %v742
    %v745 = vunpack.c.l.s4 1983009808
    %v746 = vunpack.c.0.s8 %v745
    %v747 = vlaneseq
    %v748 = vshrl.u32 %v747, 7
    %v749 = vsub.s32 %v746, %v748
    %v750 = vrot.slane %v734, %v749
    %v752 = vunpack.c.l.s4 1983009808
    %v753 = vunpack.c.0.s8 %v752
    %v754 = vlaneseq
    %v755 = vshrl.u32 %v754, 7
    %v756 = vsub.s32 %v753, %v755
    %v757 = vrot.slane %v735, %v756
    %v759 = vunpack.c.l.s4 1983009808
    %v760 = vunpack.c.0.s8 %v759
    %v761 = vlaneseq
    %v762 = vshrl.u32 %v761, 7
    %v763 = vsub.s32 %v760, %v762
    %v764 = vrot.slane %v736, %v763
    %v765 = vcombine.low %v743, %v757
    %v766 = vcombine.high %v743, %v757
    %v767 = vcombine.low %v750, %v764
    %v768 = vcombine.high %v750, %v764
    %v769 = vcombine.high %v647, %v647
    %v771 = vunpack.c.l.s4 1983009808
    %v772 = vunpack.c.0.s8 %v771
    %v773 = vlaneseq
    %v774 = vshrl.u32 %v773, 7
    %v775 = vsub.s32 %v772, %v774
    %v776 = vrot.slane %v647, %v775
    %v778 = vunpack.c.l.s4 1983009808
    %v779 = vunpack.c.0.s8 %v778
    %v780 = vlaneseq
    %v781 = vshrl.u32 %v780, 7
    %v782 = vsub.s32 %v779, %v781
    %v783 = vrot.slane %v769, %v782
    %v784 = vcombine.high %v776, %v776
    %v785 = vcombine.high %v783, %v783
    %802 = vst [vmem:[#allocation8] sm:$0xff] %v693
    %803 = vst [vmem:[#allocation8 + $0x8] sm:$0xff] %v729
    %804 = vst [vmem:[#allocation8 + $0x10] sm:$0xff] %v765
    %vm805 = vcmask 254976
    %806 = vst.msk [vmem:[#allocation8 + $0x18] sm:$0x3] %vm805, %v776
    %807 = vst [vmem:[#allocation8 + $0x1a] sm:$0xff] %v694
    %808 = vst [vmem:[#allocation8 + $0x22] sm:$0xff] %v730
    %809 = vst [vmem:[#allocation8 + $0x2a] sm:$0xff] %v766
    %810 = vst.msk [vmem:[#allocation8 + $0x32] sm:$0x3] %vm805, %v784
    %811 = vst [vmem:[#allocation8 + $0x34] sm:$0xff] %v695
    %812 = vst [vmem:[#allocation8 + $0x3c] sm:$0xff] %v731
    %813 = vst [vmem:[#allocation8 + $0x44] sm:$0xff] %v767
    %814 = vst.msk [vmem:[#allocation8 + $0x4c] sm:$0x3] %vm805, %v783
    %815 = vst [vmem:[#allocation8 + $0x4e] sm:$0xff] %v696
    %816 = vst [vmem:[#allocation8 + $0x56] sm:$0xff] %v732
    %817 = vst [vmem:[#allocation8 + $0x5e] sm:$0xff] %v768
    %818 = vst.msk [vmem:[#allocation8 + $0x66] sm:$0x3] %vm805, %v785
    // Predicated region
    $region26: #{tpu_custom_call.1} parent=1 // pred_check
      _
    $region27: #{tpu_custom_call.1} parent=1 // pred_check_branch
      %820 = sbr.rel (0) target = $region29
    $region28: #{tpu_custom_call.1} parent=1 // pred_region
      %s822 = ssub.s32 1664, 416
      %823 = vsyncadd [#allocation4], %s822
      %s824 = sshll.u32 [#allocation8], 4
      %s825 = int_to_ptr.vmem [resolvable:$true] %s824
      %830 = dma.vmem_to_hbm [thread:$0]  %s825, 416, %s3, [#allocation4], 416, 416, 26
    $region29: #{tpu_custom_call.1} parent=1 // pred_fallthru
      _
    // Predicated region
    $region30: #{tpu_custom_call.1} parent=1 // pred_check
      _
    $region31: #{tpu_custom_call.1} parent=1 // pred_check_branch
      %832 = sbr.rel (0) target = $region33
    $region32: #{tpu_custom_call.1} parent=1 // pred_region
      %833 = dma.done [#allocation4], 1664
    $region33: #{tpu_custom_call.1} parent=1 // pred_fallthru
      _
    %834 = vsyncpa [#allocation3], 1
    %835 = vsyncpa [#allocation6], 1
    %836 = vsyncpa [#allocation4], 1

</llo_original>
